<compile_context>
chip_gen: v6e
topology: v6e:2x2x1
jax: 0.10.0
libtpu: 0.0.40
codegen_flags: <defaults>
</compile_context>

<pallas_src>
import functools

import numpy as np

import jax
import jax.numpy as jnp
from jax import lax
from jax.experimental import pallas as pl
from jax.experimental.pallas import tpu as pltpu


def _round_up(v, m):
    return (v + m - 1) // m * m


def _tpu_info():
    """(physical VMEM bytes, # TensorCores per chip) with safe fallbacks."""
    vmem = 64 * 1024 * 1024          # conservative default (v7x per-TC size)
    n_tc = 1
    try:
        info = pltpu.get_tpu_info()
        vmem = int(getattr(info, "vmem_capacity_bytes", vmem))
    except Exception:
        pass
    try:
        kind = jax.devices()[0].device_kind.lower()
        if "v7" in kind or "7x" in kind:
            n_tc = 2                 # v7x: 2 TensorCores per chip
    except Exception:
        pass
    return vmem, n_tc


def _rdb_conv_kernel(x_ref, w_ref, b_ref, m_ref, o_ref, pad_ref, patch_ref, *,
                     W, HW, Cin, Cpad, Nb, base):
    """3x3 conv + ReLU + channel concat for a block of Nb batch elements.

    x_ref     : (Nb, Cin, HW)          flattened NCHW input (lane dim = H*W)
    w_ref     : (G, 9*Cpad)            weights, column = (ky*3+kx)*Cpad + c
    b_ref     : (G, 1)                 bias (f32)
    m_ref     : (2, HW)                col masks: row0 valid for dx=-1, row1 for dx=+1
    o_ref     : (Nb, Cin+G, HW)        rows [0,Cin)=x, rows [Cin,Cin+G)=relu(conv)
    pad_ref   : (Cpad, base+HW+W+1)    zero-haloed row buffer (compute dtype)
    patch_ref : (9*Cpad, Nb*HW)        im2col matrix for ONE wide MXU matmul
    """
    # Zero the halo (and the sublane-padding rows) every step — not gated on
    # program_id==0, so it stays correct when the megacore splits the
    # "parallel" batch grid across TensorCores.
    pad_ref[:, :base] = jnp.zeros((Cpad, base), pad_ref.dtype)
    pad_ref[:, base + HW:] = jnp.zeros((Cpad, W + 1), pad_ref.dtype)
    if Cpad > Cin:
        pad_ref[Cin:, base:base + HW] = jnp.zeros((Cpad - Cin, HW), pad_ref.dtype)

    masks = m_ref[...]                      # (2, HW), values in {0, 1}
    m_left = masks[0:1, :]                  # valid where x-coordinate >= 1
    m_right = masks[1:2, :]                 # valid where x-coordinate <= W-2

    offsets = [(ky - 1, kx - 1) for ky in range(3) for kx in range(3)]

    # Build the (9*Cpad, Nb*HW) im2col matrix.  Tap (dy, dx) at flattened
    # pixel p needs x[c, p + dy*W + dx] (zero outside the image): the zero
    # halo covers the dy out-of-image reads, the column masks kill the dx=+-1
    # wrap-around across row boundaries.  Every tap store is a full-sublane
    # (Cpad, HW) unmasked vst.
    for b in range(Nb):                     # static; Nb is small
        # Cast once into the halo buffer (single VPU pass, not 9x per tap).
        pad_ref[:Cin, base:base + HW] = x_ref[b].astype(pad_ref.dtype)
        for t, (dy, dx) in enumerate(offsets):
            off = base + dy * W + dx
            tap = pad_ref[:, off:off + HW]  # (Cpad, HW), compute dtype
            if dx == -1:
                tap = tap * m_left
            elif dx == 1:
                tap = tap * m_right
            patch_ref[t * Cpad:(t + 1) * Cpad, b * HW:(b + 1) * HW] = tap

    # ONE MXU matmul for the whole batch block: K = 9*Cpad, N = Nb*HW lanes.
    acc = jnp.dot(w_ref[...], patch_ref[...],
                  preferred_element_type=jnp.float32)        # (G, Nb*HW) f32
    conv = jnp.maximum(acc + b_ref[...].astype(jnp.float32), 0.0)

    # torch.cat((x, out), dim=1): one lane-dense (Cin+G, HW) store per example.
    for b in range(Nb):
        xb = x_ref[b].astype(o_ref.dtype)
        cb = conv[:, b * HW:(b + 1) * HW].astype(o_ref.dtype)
        o_ref[b] = jnp.concatenate([xb, cb], axis=0)


def rdb_conv(x_nchw, weight, bias, *, use_bf16_matmul=False, max_batch_block=8):
    """Forward of RDB_Conv.

    x_nchw : (N, Cin, H, W)
    weight : (G, Cin, 3, 3)   (PyTorch OIHW)
    bias   : (G,)
    returns: (N, Cin+G, H, W) == concat([x, relu(conv3x3(x))], channel axis)
    """
    N, Cin, H, W = x_nchw.shape
    G = weight.shape[0]
    HW = H * W

    compute_dtype = jnp.bfloat16 if use_bf16_matmul else x_nchw.dtype
    c_item = jnp.dtype(compute_dtype).itemsize
    x_item = jnp.dtype(x_nchw.dtype).itemsize

    # Sublane-pad the per-tap channel block: 8 rows for 4-byte, 16 for 2-byte.
    sub = 8 * max(1, 4 // c_item)
    Cpad = _round_up(Cin, sub)

    # Halo offset on each side of the flattened spatial axis; lane-align the
    # dx=0 taps whenever the image width is a lane multiple.
    base = W + 1
    if W % 128 == 0:
        base = _round_up(W + 1, 128)
    pad_width = base + HW + W + 1

    # Free (contiguous) flattening; the kernel consumes/produces NCHW directly.
    x_flat = x_nchw.reshape(N, Cin, HW)

    # OIHW -> (G, 9*Cpad) with column index (ky*3+kx)*Cpad + c and zero columns
    # for the sublane-padding rows, matching the im2col row order in the kernel.
    w_t = jnp.transpose(weight, (0, 2, 3, 1))                 # (G, 3, 3, Cin)
    w_t = jnp.pad(w_t, ((0, 0), (0, 0), (0, 0), (0, Cpad - Cin)))
    w2 = w_t.reshape(G, 9 * Cpad).astype(compute_dtype)
    b2 = bias.reshape(G, 1).astype(jnp.float32)

    # Precomputed (compile-time constant) left/right column-validity masks.
    col = np.arange(HW, dtype=np.int64) % W
    edge_masks = jnp.asarray(
        np.stack([(col >= 1), (col <= W - 2)]).astype(np.float32)
    ).astype(compute_dtype)                                   # (2, HW)

    # ---- Generation-aware VMEM budget, Nb selection, explicit vmem limit ----
    vmem_phys, n_tc = _tpu_info()

    pad_bytes = Cpad * _round_up(pad_width, 128) * c_item
    fixed_bytes = pad_bytes + G * 9 * Cpad * c_item + 2 * HW * c_item + G * 4
    per_example = (2 * Cin * HW * x_item                      # input  (x2 buffers)
                   + 2 * (Cin + G) * HW * x_item              # output (x2 buffers)
                   + 9 * Cpad * HW * c_item)                  # im2col columns

    budget = min(int(0.7 * vmem_phys), 48 * 1024 * 1024)
    cap = max(1, (budget - fixed_bytes) // per_example)
    cap = min(int(cap), max_batch_block, N)
    if n_tc > 1:                     # keep >= 1 grid step per TensorCore (v7x)
        cap = min(cap, max(1, N // n_tc))
    Nb = 1
    for d in range(int(cap), 0, -1):
        if N % d == 0:
            Nb = d
            break

    needed = fixed_bytes + Nb * per_example
    vmem_limit = int(min(int(0.9 * vmem_phys),
                         max(32 * 1024 * 1024, 2 * needed)))

    kernel = functools.partial(
        _rdb_conv_kernel, W=W, HW=HW, Cin=Cin, Cpad=Cpad, Nb=Nb, base=base)

    out_flat = pl.pallas_call(
        kernel,
        out_shape=jax.ShapeDtypeStruct((N, Cin + G, HW), x_nchw.dtype),
        grid=(N // Nb,),
        in_specs=[
            pl.BlockSpec((Nb, Cin, HW), lambda n: (n, 0, 0)),
            pl.BlockSpec((G, 9 * Cpad), lambda n: (0, 0)),
            pl.BlockSpec((G, 1), lambda n: (0, 0)),
            pl.BlockSpec((2, HW), lambda n: (0, 0)),
        ],
        out_specs=pl.BlockSpec((Nb, Cin + G, HW), lambda n: (n, 0, 0)),
        scratch_shapes=[
            pltpu.VMEM((Cpad, pad_width), compute_dtype),     # zero-haloed rows
            pltpu.VMEM((9 * Cpad, Nb * HW), compute_dtype),   # im2col matrix
        ],
        compiler_params=pltpu.CompilerParams(
            dimension_semantics=("parallel",),
            vmem_limit_bytes=vmem_limit),
    )(x_flat, w2, b2, edge_masks)

    return out_flat.reshape(N, Cin + G, H, W)


def _reference(x_nchw, weight, bias):
    """Pure-JAX reference matching the PyTorch forward."""
    conv = lax.conv_general_dilated(
        x_nchw, weight,
        window_strides=(1, 1), padding=((1, 1), (1, 1)),
        dimension_numbers=("NCHW", "OIHW", "NCHW"),
    ) + bias[None, :, None, None]
    return jnp.concatenate([x_nchw, jnp.maximum(conv, 0.0)], axis=1)


if __name__ == "__main__":
    # N=2, Cin=4, H=W=16, growRate G=8, kSize=3 (keep_prob unused in forward).
    N, Cin, H, W, G = 2, 4, 16, 16, 8

    key = jax.random.PRNGKey(0)
    kx_, kw_, kb_ = jax.random.split(key, 3)
    x = jax.random.normal(kx_, (N, Cin, H, W), dtype=jnp.float32)
    weight = jax.random.normal(kw_, (G, Cin, 3, 3), dtype=jnp.float32) * 0.1
    bias = jax.random.normal(kb_, (G,), dtype=jnp.float32) * 0.1

    ref = _reference(x, weight, bias)

    # Exact-numerics (f32) path: must match the PyTorch reference tightly.
    out = jax.block_until_ready(rdb_conv(x, weight, bias))
    assert out.shape == (N, Cin + G, H, W), out.shape
    assert jnp.allclose(out, ref, atol=1e-4, rtol=1e-4), "mismatch vs reference"

    # bf16 MXU path (v6e/v7x peak): intentionally looser tolerance.
    out_bf16 = jax.block_until_ready(rdb_conv(x, weight, bias, use_bf16_matmul=True))
    assert out_bf16.shape == (N, Cin + G, H, W), out_bf16.shape
    assert jnp.allclose(out_bf16, ref, atol=1e-1, rtol=1e-1), "bf16 path mismatch"

    print("KERNEL_OK")
</pallas_src>

<mosaic_0001>
module attributes {stable_mosaic.version = 11 : i64} {
  func.func @_rdb_conv_kernel(%arg0: i32, %arg1: memref<2x4x256xf32, #tpu.memory_space<vmem>>, %arg2: memref<8x72xf32, #tpu.memory_space<vmem>>, %arg3: memref<8x1xf32, #tpu.memory_space<vmem>>, %arg4: memref<2x256xf32, #tpu.memory_space<vmem>>, %arg5: memref<2x12x256xf32, #tpu.memory_space<vmem>>, %arg6: memref<8x290xf32, #tpu.memory_space<vmem>>, %arg7: memref<72x512xf32, #tpu.memory_space<vmem>>) attributes {dimension_semantics = [#tpu.dimension_semantics<parallel>], iteration_bounds = array<i64: 1>, scalar_prefetch = 0 : i64, scratch_operands = 2 : i64, tpu.core_type = #tpu.core_type<tc>, window_params = [{transform_indices = @transform_0, window_bounds = array<i64: 2, 4, 256>}, {pipeline_mode = #tpu.pipeline_mode<synchronous>, transform_indices = @transform_1, window_bounds = array<i64: 8, 72>}, {pipeline_mode = #tpu.pipeline_mode<synchronous>, transform_indices = @transform_2, window_bounds = array<i64: 8, 1>}, {pipeline_mode = #tpu.pipeline_mode<synchronous>, transform_indices = @transform_3, window_bounds = array<i64: 2, 256>}, {transform_indices = @transform_4, window_bounds = array<i64: 2, 12, 256>}]} {
    %cst = arith.constant 0.000000e+00 : f32
    %0 = vector.broadcast %cst : f32 to vector<8x17xf32>
    %c0 = arith.constant 0 : index
    %c0_0 = arith.constant 0 : index
    %1 = vector.load %arg6[%c0, %c0_0] : memref<8x290xf32, #tpu.memory_space<vmem>>, vector<8x17xf32>
    tpu.vector_store %arg6[%c0, %c0_0], %0 {strides = array<i32>} : memref<8x290xf32, #tpu.memory_space<vmem>>, vector<8x17xf32>,
    %cst_1 = arith.constant 0.000000e+00 : f32
    %2 = vector.broadcast %cst_1 : f32 to vector<8x17xf32>
    %c0_2 = arith.constant 0 : index
    %c273 = arith.constant 273 : index
    %3 = vector.load %arg6[%c0_2, %c273] : memref<8x290xf32, #tpu.memory_space<vmem>>, vector<8x17xf32>
    tpu.vector_store %arg6[%c0_2, %c273], %2 {strides = array<i32>} : memref<8x290xf32, #tpu.memory_space<vmem>>, vector<8x17xf32>,
    %cst_3 = arith.constant 0.000000e+00 : f32
    %4 = vector.broadcast %cst_3 : f32 to vector<4x256xf32>
    %c4 = arith.constant 4 : index
    %c17 = arith.constant 17 : index
    %5 = vector.load %arg6[%c4, %c17] : memref<8x290xf32, #tpu.memory_space<vmem>>, vector<4x256xf32>
    tpu.vector_store %arg6[%c4, %c17], %4 {strides = array<i32>} : memref<8x290xf32, #tpu.memory_space<vmem>>, vector<4x256xf32>,
    %c0_4 = arith.constant 0 : index
    %c0_5 = arith.constant 0 : index
    %6 = vector.load %arg4[%c0_4, %c0_5] : memref<2x256xf32, #tpu.memory_space<vmem>>, vector<2x256xf32>
    %7 = vector.extract_strided_slice %6 {offsets = [0, 0], sizes = [1, 256], strides = [1, 1]} : vector<2x256xf32> to vector<1x256xf32>
    %8 = vector.extract_strided_slice %6 {offsets = [1, 0], sizes = [1, 256], strides = [1, 1]} : vector<2x256xf32> to vector<1x256xf32>
    %c0_6 = arith.constant 0 : index
    %c0_7 = arith.constant 0 : index
    %c0_8 = arith.constant 0 : index
    %9 = vector.load %arg1[%c0_6, %c0_7, %c0_8] : memref<2x4x256xf32, #tpu.memory_space<vmem>>, vector<1x4x256xf32>
    %10 = vector.shape_cast %9 : vector<1x4x256xf32> to vector<4x256xf32>
    %c0_9 = arith.constant 0 : index
    %c17_10 = arith.constant 17 : index
    %11 = vector.load %arg6[%c0_9, %c17_10] : memref<8x290xf32, #tpu.memory_space<vmem>>, vector<4x256xf32>
    tpu.vector_store %arg6[%c0_9, %c17_10], %10 {strides = array<i32>} : memref<8x290xf32, #tpu.memory_space<vmem>>, vector<4x256xf32>,
    %c0_11 = arith.constant 0 : index
    %c0_12 = arith.constant 0 : index
    %12 = vector.load %arg6[%c0_11, %c0_12] : memref<8x290xf32, #tpu.memory_space<vmem>>, vector<8x256xf32>
    %13 = vector.broadcast %7 : vector<1x256xf32> to vector<8x256xf32>
    %14 = arith.mulf %12, %13 : vector<8x256xf32>
    %c0_13 = arith.constant 0 : index
    %c0_14 = arith.constant 0 : index
    %15 = vector.load %arg7[%c0_13, %c0_14] : memref<72x512xf32, #tpu.memory_space<vmem>>, vector<8x256xf32>
    tpu.vector_store %arg7[%c0_13, %c0_14], %14 {strides = array<i32>} : memref<72x512xf32, #tpu.memory_space<vmem>>, vector<8x256xf32>,
    %c0_15 = arith.constant 0 : index
    %c1 = arith.constant 1 : index
    %16 = vector.load %arg6[%c0_15, %c1] : memref<8x290xf32, #tpu.memory_space<vmem>>, vector<8x256xf32>
    %c8 = arith.constant 8 : index
    %c0_16 = arith.constant 0 : index
    %17 = vector.load %arg7[%c8, %c0_16] : memref<72x512xf32, #tpu.memory_space<vmem>>, vector<8x256xf32>
    tpu.vector_store %arg7[%c8, %c0_16], %16 {strides = array<i32>} : memref<72x512xf32, #tpu.memory_space<vmem>>, vector<8x256xf32>,
    %c0_17 = arith.constant 0 : index
    %c2 = arith.constant 2 : index
    %18 = vector.load %arg6[%c0_17, %c2] : memref<8x290xf32, #tpu.memory_space<vmem>>, vector<8x256xf32>
    %19 = vector.broadcast %8 : vector<1x256xf32> to vector<8x256xf32>
    %20 = arith.mulf %18, %19 : vector<8x256xf32>
    %c16 = arith.constant 16 : index
    %c0_18 = arith.constant 0 : index
    %21 = vector.load %arg7[%c16, %c0_18] : memref<72x512xf32, #tpu.memory_space<vmem>>, vector<8x256xf32>
    tpu.vector_store %arg7[%c16, %c0_18], %20 {strides = array<i32>} : memref<72x512xf32, #tpu.memory_space<vmem>>, vector<8x256xf32>,
    %c0_19 = arith.constant 0 : index
    %c16_20 = arith.constant 16 : index
    %22 = vector.load %arg6[%c0_19, %c16_20] : memref<8x290xf32, #tpu.memory_space<vmem>>, vector<8x256xf32>
    %23 = vector.broadcast %7 : vector<1x256xf32> to vector<8x256xf32>
    %24 = arith.mulf %22, %23 : vector<8x256xf32>
    %c24 = arith.constant 24 : index
    %c0_21 = arith.constant 0 : index
    %25 = vector.load %arg7[%c24, %c0_21] : memref<72x512xf32, #tpu.memory_space<vmem>>, vector<8x256xf32>
    tpu.vector_store %arg7[%c24, %c0_21], %24 {strides = array<i32>} : memref<72x512xf32, #tpu.memory_space<vmem>>, vector<8x256xf32>,
    %c0_22 = arith.constant 0 : index
    %c17_23 = arith.constant 17 : index
    %26 = vector.load %arg6[%c0_22, %c17_23] : memref<8x290xf32, #tpu.memory_space<vmem>>, vector<8x256xf32>
    %c32 = arith.constant 32 : index
    %c0_24 = arith.constant 0 : index
    %27 = vector.load %arg7[%c32, %c0_24] : memref<72x512xf32, #tpu.memory_space<vmem>>, vector<8x256xf32>
    tpu.vector_store %arg7[%c32, %c0_24], %26 {strides = array<i32>} : memref<72x512xf32, #tpu.memory_space<vmem>>, vector<8x256xf32>,
    %c0_25 = arith.constant 0 : index
    %c18 = arith.constant 18 : index
    %28 = vector.load %arg6[%c0_25, %c18] : memref<8x290xf32, #tpu.memory_space<vmem>>, vector<8x256xf32>
    %29 = vector.broadcast %8 : vector<1x256xf32> to vector<8x256xf32>
    %30 = arith.mulf %28, %29 : vector<8x256xf32>
    %c40 = arith.constant 40 : index
    %c0_26 = arith.constant 0 : index
    %31 = vector.load %arg7[%c40, %c0_26] : memref<72x512xf32, #tpu.memory_space<vmem>>, vector<8x256xf32>
    tpu.vector_store %arg7[%c40, %c0_26], %30 {strides = array<i32>} : memref<72x512xf32, #tpu.memory_space<vmem>>, vector<8x256xf32>,
    %c0_27 = arith.constant 0 : index
    %c32_28 = arith.constant 32 : index
    %32 = vector.load %arg6[%c0_27, %c32_28] : memref<8x290xf32, #tpu.memory_space<vmem>>, vector<8x256xf32>
    %33 = vector.broadcast %7 : vector<1x256xf32> to vector<8x256xf32>
    %34 = arith.mulf %32, %33 : vector<8x256xf32>
    %c48 = arith.constant 48 : index
    %c0_29 = arith.constant 0 : index
    %35 = vector.load %arg7[%c48, %c0_29] : memref<72x512xf32, #tpu.memory_space<vmem>>, vector<8x256xf32>
    tpu.vector_store %arg7[%c48, %c0_29], %34 {strides = array<i32>} : memref<72x512xf32, #tpu.memory_space<vmem>>, vector<8x256xf32>,
    %c0_30 = arith.constant 0 : index
    %c33 = arith.constant 33 : index
    %36 = vector.load %arg6[%c0_30, %c33] : memref<8x290xf32, #tpu.memory_space<vmem>>, vector<8x256xf32>
    %c56 = arith.constant 56 : index
    %c0_31 = arith.constant 0 : index
    %37 = vector.load %arg7[%c56, %c0_31] : memref<72x512xf32, #tpu.memory_space<vmem>>, vector<8x256xf32>
    tpu.vector_store %arg7[%c56, %c0_31], %36 {strides = array<i32>} : memref<72x512xf32, #tpu.memory_space<vmem>>, vector<8x256xf32>,
    %c0_32 = arith.constant 0 : index
    %c34 = arith.constant 34 : index
    %38 = vector.load %arg6[%c0_32, %c34] : memref<8x290xf32, #tpu.memory_space<vmem>>, vector<8x256xf32>
    %39 = vector.broadcast %8 : vector<1x256xf32> to vector<8x256xf32>
    %40 = arith.mulf %38, %39 : vector<8x256xf32>
    %c64 = arith.constant 64 : index
    %c0_33 = arith.constant 0 : index
    %41 = vector.load %arg7[%c64, %c0_33] : memref<72x512xf32, #tpu.memory_space<vmem>>, vector<8x256xf32>
    tpu.vector_store %arg7[%c64, %c0_33], %40 {strides = array<i32>} : memref<72x512xf32, #tpu.memory_space<vmem>>, vector<8x256xf32>,
    %c1_34 = arith.constant 1 : index
    %c0_35 = arith.constant 0 : index
    %c0_36 = arith.constant 0 : index
    %42 = vector.load %arg1[%c1_34, %c0_35, %c0_36] : memref<2x4x256xf32, #tpu.memory_space<vmem>>, vector<1x4x256xf32>
    %43 = vector.shape_cast %42 : vector<1x4x256xf32> to vector<4x256xf32>
    %c0_37 = arith.constant 0 : index
    %c17_38 = arith.constant 17 : index
    %44 = vector.load %arg6[%c0_37, %c17_38] : memref<8x290xf32, #tpu.memory_space<vmem>>, vector<4x256xf32>
    tpu.vector_store %arg6[%c0_37, %c17_38], %43 {strides = array<i32>} : memref<8x290xf32, #tpu.memory_space<vmem>>, vector<4x256xf32>,
    %c0_39 = arith.constant 0 : index
    %c0_40 = arith.constant 0 : index
    %45 = vector.load %arg6[%c0_39, %c0_40] : memref<8x290xf32, #tpu.memory_space<vmem>>, vector<8x256xf32>
    %46 = vector.broadcast %7 : vector<1x256xf32> to vector<8x256xf32>
    %47 = arith.mulf %45, %46 : vector<8x256xf32>
    %c0_41 = arith.constant 0 : index
    %c256 = arith.constant 256 : index
    %48 = vector.load %arg7[%c0_41, %c256] : memref<72x512xf32, #tpu.memory_space<vmem>>, vector<8x256xf32>
    tpu.vector_store %arg7[%c0_41, %c256], %47 {strides = array<i32>} : memref<72x512xf32, #tpu.memory_space<vmem>>, vector<8x256xf32>,
    %c0_42 = arith.constant 0 : index
    %c1_43 = arith.constant 1 : index
    %49 = vector.load %arg6[%c0_42, %c1_43] : memref<8x290xf32, #tpu.memory_space<vmem>>, vector<8x256xf32>
    %c8_44 = arith.constant 8 : index
    %c256_45 = arith.constant 256 : index
    %50 = vector.load %arg7[%c8_44, %c256_45] : memref<72x512xf32, #tpu.memory_space<vmem>>, vector<8x256xf32>
    tpu.vector_store %arg7[%c8_44, %c256_45], %49 {strides = array<i32>} : memref<72x512xf32, #tpu.memory_space<vmem>>, vector<8x256xf32>,
    %c0_46 = arith.constant 0 : index
    %c2_47 = arith.constant 2 : index
    %51 = vector.load %arg6[%c0_46, %c2_47] : memref<8x290xf32, #tpu.memory_space<vmem>>, vector<8x256xf32>
    %52 = vector.broadcast %8 : vector<1x256xf32> to vector<8x256xf32>
    %53 = arith.mulf %51, %52 : vector<8x256xf32>
    %c16_48 = arith.constant 16 : index
    %c256_49 = arith.constant 256 : index
    %54 = vector.load %arg7[%c16_48, %c256_49] : memref<72x512xf32, #tpu.memory_space<vmem>>, vector<8x256xf32>
    tpu.vector_store %arg7[%c16_48, %c256_49], %53 {strides = array<i32>} : memref<72x512xf32, #tpu.memory_space<vmem>>, vector<8x256xf32>,
    %c0_50 = arith.constant 0 : index
    %c16_51 = arith.constant 16 : index
    %55 = vector.load %arg6[%c0_50, %c16_51] : memref<8x290xf32, #tpu.memory_space<vmem>>, vector<8x256xf32>
    %56 = vector.broadcast %7 : vector<1x256xf32> to vector<8x256xf32>
    %57 = arith.mulf %55, %56 : vector<8x256xf32>
    %c24_52 = arith.constant 24 : index
    %c256_53 = arith.constant 256 : index
    %58 = vector.load %arg7[%c24_52, %c256_53] : memref<72x512xf32, #tpu.memory_space<vmem>>, vector<8x256xf32>
    tpu.vector_store %arg7[%c24_52, %c256_53], %57 {strides = array<i32>} : memref<72x512xf32, #tpu.memory_space<vmem>>, vector<8x256xf32>,
    %c0_54 = arith.constant 0 : index
    %c17_55 = arith.constant 17 : index
    %59 = vector.load %arg6[%c0_54, %c17_55] : memref<8x290xf32, #tpu.memory_space<vmem>>, vector<8x256xf32>
    %c32_56 = arith.constant 32 : index
    %c256_57 = arith.constant 256 : index
    %60 = vector.load %arg7[%c32_56, %c256_57] : memref<72x512xf32, #tpu.memory_space<vmem>>, vector<8x256xf32>
    tpu.vector_store %arg7[%c32_56, %c256_57], %59 {strides = array<i32>} : memref<72x512xf32, #tpu.memory_space<vmem>>, vector<8x256xf32>,
    %c0_58 = arith.constant 0 : index
    %c18_59 = arith.constant 18 : index
    %61 = vector.load %arg6[%c0_58, %c18_59] : memref<8x290xf32, #tpu.memory_space<vmem>>, vector<8x256xf32>
    %62 = vector.broadcast %8 : vector<1x256xf32> to vector<8x256xf32>
    %63 = arith.mulf %61, %62 : vector<8x256xf32>
    %c40_60 = arith.constant 40 : index
    %c256_61 = arith.constant 256 : index
    %64 = vector.load %arg7[%c40_60, %c256_61] : memref<72x512xf32, #tpu.memory_space<vmem>>, vector<8x256xf32>
    tpu.vector_store %arg7[%c40_60, %c256_61], %63 {strides = array<i32>} : memref<72x512xf32, #tpu.memory_space<vmem>>, vector<8x256xf32>,
    %c0_62 = arith.constant 0 : index
    %c32_63 = arith.constant 32 : index
    %65 = vector.load %arg6[%c0_62, %c32_63] : memref<8x290xf32, #tpu.memory_space<vmem>>, vector<8x256xf32>
    %66 = vector.broadcast %7 : vector<1x256xf32> to vector<8x256xf32>
    %67 = arith.mulf %65, %66 : vector<8x256xf32>
    %c48_64 = arith.constant 48 : index
    %c256_65 = arith.constant 256 : index
    %68 = vector.load %arg7[%c48_64, %c256_65] : memref<72x512xf32, #tpu.memory_space<vmem>>, vector<8x256xf32>
    tpu.vector_store %arg7[%c48_64, %c256_65], %67 {strides = array<i32>} : memref<72x512xf32, #tpu.memory_space<vmem>>, vector<8x256xf32>,
    %c0_66 = arith.constant 0 : index
    %c33_67 = arith.constant 33 : index
    %69 = vector.load %arg6[%c0_66, %c33_67] : memref<8x290xf32, #tpu.memory_space<vmem>>, vector<8x256xf32>
    %c56_68 = arith.constant 56 : index
    %c256_69 = arith.constant 256 : index
    %70 = vector.load %arg7[%c56_68, %c256_69] : memref<72x512xf32, #tpu.memory_space<vmem>>, vector<8x256xf32>
    tpu.vector_store %arg7[%c56_68, %c256_69], %69 {strides = array<i32>} : memref<72x512xf32, #tpu.memory_space<vmem>>, vector<8x256xf32>,
    %c0_70 = arith.constant 0 : index
    %c34_71 = arith.constant 34 : index
    %71 = vector.load %arg6[%c0_70, %c34_71] : memref<8x290xf32, #tpu.memory_space<vmem>>, vector<8x256xf32>
    %72 = vector.broadcast %8 : vector<1x256xf32> to vector<8x256xf32>
    %73 = arith.mulf %71, %72 : vector<8x256xf32>
    %c64_72 = arith.constant 64 : index
    %c256_73 = arith.constant 256 : index
    %74 = vector.load %arg7[%c64_72, %c256_73] : memref<72x512xf32, #tpu.memory_space<vmem>>, vector<8x256xf32>
    tpu.vector_store %arg7[%c64_72, %c256_73], %73 {strides = array<i32>} : memref<72x512xf32, #tpu.memory_space<vmem>>, vector<8x256xf32>,
    %c0_74 = arith.constant 0 : index
    %c0_75 = arith.constant 0 : index
    %75 = vector.load %arg2[%c0_74, %c0_75] : memref<8x72xf32, #tpu.memory_space<vmem>>, vector<8x72xf32>
    %c0_76 = arith.constant 0 : index
    %c0_77 = arith.constant 0 : index
    %76 = vector.load %arg7[%c0_76, %c0_77] : memref<72x512xf32, #tpu.memory_space<vmem>>, vector<72x512xf32>
    %cst_78 = arith.constant dense<0.000000e+00> : vector<8x512xf32>
    %77 = tpu.matmul %75, %76, %cst_78 {dimension_numbers = #tpu.dot_dimension_numbers<[1], [0], [0], [1], [0, 0, 1, 1], [], []>} : vector<8x72xf32>, vector<72x512xf32>, vector<8x512xf32> -> vector<8x512xf32>
    %c0_79 = arith.constant 0 : index
    %c0_80 = arith.constant 0 : index
    %78 = vector.load %arg3[%c0_79, %c0_80] : memref<8x1xf32, #tpu.memory_space<vmem>>, vector<8x1xf32>
    %79 = vector.broadcast %78 : vector<8x1xf32> to vector<8x512xf32>
    %80 = arith.addf %77, %79 : vector<8x512xf32>
    %cst_81 = arith.constant 0.000000e+00 : f32
    %81 = vector.broadcast %cst_81 : f32 to vector<8x512xf32>
    %82 = arith.maximumf %80, %81 : vector<8x512xf32>
    %c0_82 = arith.constant 0 : index
    %c0_83 = arith.constant 0 : index
    %c0_84 = arith.constant 0 : index
    %83 = vector.load %arg1[%c0_82, %c0_83, %c0_84] : memref<2x4x256xf32, #tpu.memory_space<vmem>>, vector<1x4x256xf32>
    %84 = vector.shape_cast %83 : vector<1x4x256xf32> to vector<4x256xf32>
    %85 = vector.extract_strided_slice %82 {offsets = [0, 0], sizes = [8, 256], strides = [1, 1]} : vector<8x512xf32> to vector<8x256xf32>
    %86 = tpu.concatenate %84, %85 in 0 : vector<4x256xf32>, vector<8x256xf32> -> vector<12x256xf32>
    %c0_85 = arith.constant 0 : index
    %c0_86 = arith.constant 0 : index
    %c0_87 = arith.constant 0 : index
    %87 = vector.load %arg5[%c0_85, %c0_86, %c0_87] : memref<2x12x256xf32, #tpu.memory_space<vmem>>, vector<1x12x256xf32>
    %88 = vector.shape_cast %87 : vector<1x12x256xf32> to vector<12x256xf32>
    %89 = vector.shape_cast %86 : vector<12x256xf32> to vector<1x12x256xf32>
    tpu.vector_store %arg5[%c0_85, %c0_86, %c0_87], %89 {strides = array<i32>} : memref<2x12x256xf32, #tpu.memory_space<vmem>>, vector<1x12x256xf32>,
    %c1_88 = arith.constant 1 : index
    %c0_89 = arith.constant 0 : index
    %c0_90 = arith.constant 0 : index
    %90 = vector.load %arg1[%c1_88, %c0_89, %c0_90] : memref<2x4x256xf32, #tpu.memory_space<vmem>>, vector<1x4x256xf32>
    %91 = vector.shape_cast %90 : vector<1x4x256xf32> to vector<4x256xf32>
    %92 = vector.extract_strided_slice %82 {offsets = [0, 256], sizes = [8, 256], strides = [1, 1]} : vector<8x512xf32> to vector<8x256xf32>
    %93 = tpu.concatenate %91, %92 in 0 : vector<4x256xf32>, vector<8x256xf32> -> vector<12x256xf32>
    %c1_91 = arith.constant 1 : index
    %c0_92 = arith.constant 0 : index
    %c0_93 = arith.constant 0 : index
    %94 = vector.load %arg5[%c1_91, %c0_92, %c0_93] : memref<2x12x256xf32, #tpu.memory_space<vmem>>, vector<1x12x256xf32>
    %95 = vector.shape_cast %94 : vector<1x12x256xf32> to vector<12x256xf32>
    %96 = vector.shape_cast %93 : vector<12x256xf32> to vector<1x12x256xf32>
    tpu.vector_store %arg5[%c1_91, %c0_92, %c0_93], %96 {strides = array<i32>} : memref<2x12x256xf32, #tpu.memory_space<vmem>>, vector<1x12x256xf32>,
    return
  }
  func.func @transform_0(%arg0: i32) -> (i32, i32, i32) {
    %c0_i32 = arith.constant 0 : i32
    %c0_i32_0 = arith.constant 0 : i32
    %c0_i32_1 = arith.constant 0 : i32
    return %arg0, %c0_i32, %c0_i32_0 : i32, i32, i32
  }
  func.func @transform_1(%arg0: i32) -> (i32, i32) {
    %c0_i32 = arith.constant 0 : i32
    %c0_i32_0 = arith.constant 0 : i32
    %c0_i32_1 = arith.constant 0 : i32
    return %c0_i32, %c0_i32_0 : i32, i32
  }
  func.func @transform_2(%arg0: i32) -> (i32, i32) {
    %c0_i32 = arith.constant 0 : i32
    %c0_i32_0 = arith.constant 0 : i32
    %c0_i32_1 = arith.constant 0 : i32
    return %c0_i32, %c0_i32_0 : i32, i32
  }
  func.func @transform_3(%arg0: i32) -> (i32, i32) {
    %c0_i32 = arith.constant 0 : i32
    %c0_i32_0 = arith.constant 0 : i32
    %c0_i32_1 = arith.constant 0 : i32
    return %c0_i32, %c0_i32_0 : i32, i32
  }
  func.func @transform_4(%arg0: i32) -> (i32, i32, i32) {
    %c0_i32 = arith.constant 0 : i32
    %c0_i32_0 = arith.constant 0 : i32
    %c0_i32_1 = arith.constant 0 : i32
    return %arg0, %c0_i32, %c0_i32_0 : i32, i32, i32
  }
}

</mosaic_0001>

<llo_original>
// kernel: tpu_custom_call.1
$region0: #{tpu_custom_call.1}
  #allocation0 [shape = 'u32[]', space=smem, size = 0x4, offset = 0x4, fixed_abs, tag = 'smem constant byte address 0x4 - core index']
  #allocation1 [shape = 'u32[144,128]{1,0:T(1,128)}', space=vmem, size = 0x12000, scoped, tag = 'internal scratch']
  #allocation2 [shape = 'f32[8,290]{1,0:T(8,128)}', space=vmem, size = 0x3000, scoped, tag = 'scratch operand']
  #allocation3 [shape = 'f32[72,512]{1,0:T(8,128)}', space=vmem, size = 0x24000, scoped, tag = 'scratch operand']
  %s0 = inlined_call_operand.hbm [shape: f32[2,4,256], index: 0, kind: input, shape index: {}]
  %s1 = inlined_call_operand.vmem [shape: f32[8,72], index: 1, kind: input, shape index: {}]
  %s2 = inlined_call_operand.vmem [shape: f32[8,1], index: 2, kind: input, shape index: {}]
  %s3 = inlined_call_operand.vmem [shape: f32[2,256], index: 3, kind: input, shape index: {}]
  %s4 = inlined_call_operand.vmem [shape: f32[2,12,256], index: 4, kind: output, shape index: {}]
  %s5 = sld [smem:[#allocation0]]
  $region30: #{tpu_custom_call.1} parent=0
    _
  %s7 = ssub.s32 1, %s5
  %s8 = scalar_select 0, %s7, %s5
  $region1: #{tpu_custom_call.1} parent=0
    #allocation4 [shape = 'u8[8192]{0}', space=vmem, size = 0x2000, scoped, tag = 'input window, operand 0, single buffered']
    #allocation5 [shape = 's32[1]{0}', space=sflag, size = 0x4, scoped, tag = 'scoped memory for tpu_custom_call.1']
    %9 = vsyncpa [#allocation5], 0
    // Predicated region
    $region2: #{tpu_custom_call.1} parent=1 // pred_check
      _
    $region3: #{tpu_custom_call.1} parent=1 // pred_check_branch
      %11 = sbr.rel (0) target = $region5
    $region4: #{tpu_custom_call.1} parent=1 // pred_region
      %s13 = ssub.s32 256, 256
      %14 = vsyncadd [#allocation5], %s13
      %s15 = sshll.u32 [#allocation4], 4
      %s16 = int_to_ptr.vmem [resolvable:$true] %s15
      %21 = dma.hbm_to_vmem [thread:$0]  %s0, 256, %s16, [#allocation5], 128, 128, 8
    $region5: #{tpu_custom_call.1} parent=1 // pred_fallthru
      _
    // Predicated region
    $region6: #{tpu_custom_call.1} parent=1 // pred_check
      _
    $region7: #{tpu_custom_call.1} parent=1 // pred_check_branch
      %23 = sbr.rel (0) target = $region9
    $region8: #{tpu_custom_call.1} parent=1 // pred_region
      _
    $region9: #{tpu_custom_call.1} parent=1 // pred_fallthru
      _
    // Predicated region
    $region10: #{tpu_custom_call.1} parent=1 // pred_check
      _
    $region11: #{tpu_custom_call.1} parent=1 // pred_check_branch
      %25 = sbr.rel (0) target = $region13
    $region12: #{tpu_custom_call.1} parent=1 // pred_region
      _
    $region13: #{tpu_custom_call.1} parent=1 // pred_fallthru
      _
    // Predicated region
    $region14: #{tpu_custom_call.1} parent=1 // pred_check
      _
    $region15: #{tpu_custom_call.1} parent=1 // pred_check_branch
      %27 = sbr.rel (0) target = $region17
    $region16: #{tpu_custom_call.1} parent=1 // pred_region
      _
    $region17: #{tpu_custom_call.1} parent=1 // pred_fallthru
      _
    // Predicated region
    $region18: #{tpu_custom_call.1} parent=1 // pred_check
      _
    $region19: #{tpu_custom_call.1} parent=1 // pred_check_branch
      %29 = sbr.rel (0) target = $region21
    $region20: #{tpu_custom_call.1} parent=1 // pred_region
      %30 = dma.done [#allocation5], 256
    $region21: #{tpu_custom_call.1} parent=1 // pred_fallthru
      _
    %vm31 = vcmask 138240
    %32 = vst.msk [vmem:[#allocation2] sm:$0xff] %vm31, 0.0
    %vm33 = vcmask 277640
    %34 = vst.msk [vmem:[#allocation2 + $0x10] sm:$0xff] %vm33, 0.0
    %vm35 = vcmask 1047692
    %36 = vst.msk [vmem:[#allocation2] sm:$0xf0] %vm35, 0.0
    %37 = vst [vmem:[#allocation2 + $0x8] sm:$0xf0] 0.0
    %vm38 = vcmask 138244
    %39 = vst.msk [vmem:[#allocation2 + $0x10] sm:$0xf0] %vm38, 0.0
    %v40 = vld [vmem:[%s3] sm:$0xf]
    %v41 = vld [vmem:[#allocation4] sm:$0xff]
    %v43 = vcombine.high %v41, %v41
    %44 = vrot.lane.b32.xlu0 %v41, 17
    %v45 = vpop.permute.xlu0 %44
    %46 = vrot.lane.b32.xlu0 %v43, 17
    %v47 = vpop.permute.xlu0 %46
    %v48 = vsel %vm31, %v45, %v47
    %vm52 = vcmask 1043592
    %53 = vst.msk [vmem:[#allocation2] sm:$0xf] %vm52, %v45
    %54 = vst [vmem:[#allocation2 + $0x8] sm:$0xf] %v48
    %vm55 = vcmask 134144
    %56 = vst.msk [vmem:[#allocation2 + $0x10] sm:$0xf] %vm55, %v47
    %v57 = vld [vmem:[#allocation2] sm:$0xff]
    %v58 = vld [vmem:[#allocation2 + $0x8] sm:$0xff]
    %v60 = vlaneseq
    %v61 = vshrl.u32 %v60, 7
    %v62 = vsub.s32 0, %v61
    %v63 = vrot.slane %v40, %v62
    %v64 = vlaneseq
    %v65 = vshrl.u32 %v64, 7
    %v66 = vsub.s32 2, %v65
    %v67 = vrot.slane %v40, %v66
    %v70 = vlaneseq
    %v71 = vshrl.u32 %v70, 7
    %v72 = vsub.s32 0, %v71
    %v73 = vrot.slane %v63, %v72
    %v74 = vlaneseq
    %v75 = vshrl.u32 %v74, 7
    %v76 = vsub.s32 0, %v75
    %v77 = vrot.slane %v67, %v76
    %v78 = vmul.f32 %v57, %v73
    %v79 = vmul.f32 %v58, %v77
    %80 = vst [vmem:[#allocation3] sm:$0xff] %v78
    %81 = vst [vmem:[#allocation3 + $0x8] sm:$0xff] %v79
    %v82 = vld [vmem:[#allocation2] sm:$0xff]
    %v83 = vld [vmem:[#allocation2 + $0x8] sm:$0xff]
    %v84 = vld [vmem:[#allocation2 + $0x10] sm:$0xff]
    %88 = vrot.lane.b32.xlu0 %v82, 127
    %v89 = vpop.permute.xlu0 %88
    %90 = vrot.lane.b32.xlu0 %v83, 127
    %v91 = vpop.permute.xlu0 %90
    %92 = vrot.lane.b32.xlu0 %v84, 127
    %v93 = vpop.permute.xlu0 %92
    %vm94 = vcmask 1039360
    %v95 = vsel %vm94, %v89, %v91
    %v96 = vsel %vm94, %v91, %v93
    %99 = vst [vmem:[#allocation3 + $0x20] sm:$0xff] %v95
    %100 = vst [vmem:[#allocation3 + $0x28] sm:$0xff] %v96
    %v101 = vld [vmem:[#allocation2] sm:$0xff]
    %v102 = vld [vmem:[#allocation2 + $0x8] sm:$0xff]
    %v103 = vld [vmem:[#allocation2 + $0x10] sm:$0xff]
    %v104 = vlaneseq
    %v105 = vshrl.u32 %v104, 7
    %v106 = vsub.s32 1, %v105
    %v107 = vrot.slane %v40, %v106
    %v108 = vlaneseq
    %v109 = vshrl.u32 %v108, 7
    %v110 = vsub.s32 3, %v109
    %v111 = vrot.slane %v40, %v110
    %v114 = vlaneseq
    %v115 = vshrl.u32 %v114, 7
    %v116 = vsub.s32 1, %v115
    %v117 = vrot.slane %v107, %v116
    %v118 = vlaneseq
    %v119 = vshrl.u32 %v118, 7
    %v120 = vsub.s32 1, %v119
    %v121 = vrot.slane %v111, %v120
    %124 = vrot.lane.b32.xlu0 %v117, 2
    %v125 = vpop.permute.xlu0 %124
    %126 = vrot.lane.b32.xlu0 %v121, 2
    %v127 = vpop.permute.xlu0 %126
    %vm128 = vcmask 15360
    %v129 = vsel %vm128, %v125, %v127
    %v133 = vmul.f32 %v101, %v125
    %v134 = vmul.f32 %v102, %v129
    %v135 = vmul.f32 %v103, %v127
    %139 = vrot.lane.b32.xlu0 %v133, 126
    %v140 = vpop.permute.xlu0 %139
    %141 = vrot.lane.b32.xlu0 %v134, 126
    %v142 = vpop.permute.xlu0 %141
    %143 = vrot.lane.b32.xlu0 %v135, 126
    %v144 = vpop.permute.xlu0 %143
    %vm145 = vcmask 1031168
    %v146 = vsel %vm145, %v140, %v142
    %v147 = vsel %vm145, %v142, %v144
    %150 = vst [vmem:[#allocation3 + $0x40] sm:$0xff] %v146
    %151 = vst [vmem:[#allocation3 + $0x48] sm:$0xff] %v147
    %v152 = vld [vmem:[#allocation2] sm:$0xff]
    %v153 = vld [vmem:[#allocation2 + $0x8] sm:$0xff]
    %v154 = vld [vmem:[#allocation2 + $0x10] sm:$0xff]
    %157 = vrot.lane.b32.xlu0 %v73, 16
    %v158 = vpop.permute.xlu0 %157
    %159 = vrot.lane.b32.xlu0 %v77, 16
    %v160 = vpop.permute.xlu0 %159
    %vm161 = vcmask 130048
    %v162 = vsel %vm161, %v158, %v160
    %v166 = vmul.f32 %v152, %v158
    %v167 = vmul.f32 %v153, %v162
    %v168 = vmul.f32 %v154, %v160
    %172 = vrot.lane.b32.xlu0 %v166, 112
    %v173 = vpop.permute.xlu0 %172
    %174 = vrot.lane.b32.xlu0 %v167, 112
    %v175 = vpop.permute.xlu0 %174
    %176 = vrot.lane.b32.xlu0 %v168, 112
    %v177 = vpop.permute.xlu0 %176
    %vm178 = vcmask 916480
    %v179 = vsel %vm178, %v173, %v175
    %v180 = vsel %vm178, %v175, %v177
    %183 = vst [vmem:[#allocation3 + $0x60] sm:$0xff] %v179
    %184 = vst [vmem:[#allocation3 + $0x68] sm:$0xff] %v180
    %v185 = vld [vmem:[#allocation2] sm:$0xff]
    %v186 = vld [vmem:[#allocation2 + $0x8] sm:$0xff]
    %v187 = vld [vmem:[#allocation2 + $0x10] sm:$0xff]
    %191 = vrot.lane.b32.xlu0 %v185, 111
    %v192 = vpop.permute.xlu0 %191
    %193 = vrot.lane.b32.xlu0 %v186, 111
    %v194 = vpop.permute.xlu0 %193
    %195 = vrot.lane.b32.xlu0 %v187, 111
    %v196 = vpop.permute.xlu0 %195
    %vm197 = vcmask 908288
    %v198 = vsel %vm197, %v192, %v194
    %v199 = vsel %vm197, %v194, %v196
    %202 = vst [vmem:[#allocation3 + $0x80] sm:$0xff] %v198
    %203 = vst [vmem:[#allocation3 + $0x88] sm:$0xff] %v199
    %v204 = vld [vmem:[#allocation2] sm:$0xff]
    %v205 = vld [vmem:[#allocation2 + $0x8] sm:$0xff]
    %v206 = vld [vmem:[#allocation2 + $0x10] sm:$0xff]
    %207 = vrot.lane.b32.xlu0 %v117, 18
    %v208 = vpop.permute.xlu0 %207
    %209 = vrot.lane.b32.xlu0 %v121, 18
    %v210 = vpop.permute.xlu0 %209
    %vm211 = vcmask 146432
    %v212 = vsel %vm211, %v208, %v210
    %v216 = vmul.f32 %v204, %v208
    %v217 = vmul.f32 %v205, %v212
    %v218 = vmul.f32 %v206, %v210
    %222 = vrot.lane.b32.xlu0 %v216, 110
    %v223 = vpop.permute.xlu0 %222
    %224 = vrot.lane.b32.xlu0 %v217, 110
    %v225 = vpop.permute.xlu0 %224
    %226 = vrot.lane.b32.xlu0 %v218, 110
    %v227 = vpop.permute.xlu0 %226
    %vm228 = vcmask 900096
    %v229 = vsel %vm228, %v223, %v225
    %v230 = vsel %vm228, %v225, %v227
    %233 = vst [vmem:[#allocation3 + $0xa0] sm:$0xff] %v229
    %234 = vst [vmem:[#allocation3 + $0xa8] sm:$0xff] %v230
    %v235 = vld [vmem:[#allocation2] sm:$0xff]
    %v236 = vld [vmem:[#allocation2 + $0x8] sm:$0xff]
    %v237 = vld [vmem:[#allocation2 + $0x10] sm:$0xff]
    %238 = vrot.lane.b32.xlu0 %v73, 32
    %v239 = vpop.permute.xlu0 %238
    %240 = vrot.lane.b32.xlu0 %v77, 32
    %v241 = vpop.permute.xlu0 %240
    %vm242 = vcmask 261120
    %v243 = vsel %vm242, %v239, %v241
    %v247 = vmul.f32 %v235, %v239
    %v248 = vmul.f32 %v236, %v243
    %v249 = vmul.f32 %v237, %v241
    %253 = vrot.lane.b32.xlu0 %v247, 96
    %v254 = vpop.permute.xlu0 %253
    %255 = vrot.lane.b32.xlu0 %v248, 96
    %v256 = vpop.permute.xlu0 %255
    %257 = vrot.lane.b32.xlu0 %v249, 96
    %v258 = vpop.permute.xlu0 %257
    %vm259 = vcmask 785408
    %v260 = vsel %vm259, %v254, %v256
    %v261 = vsel %vm259, %v256, %v258
    %264 = vst [vmem:[#allocation3 + $0xc0] sm:$0xff] %v260
    %265 = vst [vmem:[#allocation3 + $0xc8] sm:$0xff] %v261
    %v266 = vld [vmem:[#allocation2] sm:$0xff]
    %v267 = vld [vmem:[#allocation2 + $0x8] sm:$0xff]
    %v268 = vld [vmem:[#allocation2 + $0x10] sm:$0xff]
    %272 = vrot.lane.b32.xlu0 %v266, 95
    %v273 = vpop.permute.xlu0 %272
    %274 = vrot.lane.b32.xlu0 %v267, 95
    %v275 = vpop.permute.xlu0 %274
    %276 = vrot.lane.b32.xlu0 %v268, 95
    %v277 = vpop.permute.xlu0 %276
    %vm278 = vcmask 777216
    %v279 = vsel %vm278, %v273, %v275
    %v280 = vsel %vm278, %v275, %v277
    %283 = vst [vmem:[#allocation3 + $0xe0] sm:$0xff] %v279
    %284 = vst [vmem:[#allocation3 + $0xe8] sm:$0xff] %v280
    %v285 = vld [vmem:[#allocation2] sm:$0xff]
    %v286 = vld [vmem:[#allocation2 + $0x8] sm:$0xff]
    %v287 = vld [vmem:[#allocation2 + $0x10] sm:$0xff]
    %288 = vrot.lane.b32.xlu0 %v117, 34
    %v289 = vpop.permute.xlu0 %288
    %290 = vrot.lane.b32.xlu0 %v121, 34
    %v291 = vpop.permute.xlu0 %290
    %vm292 = vcmask 277504
    %v293 = vsel %vm292, %v289, %v291
    %v297 = vmul.f32 %v285, %v289
    %v298 = vmul.f32 %v286, %v293
    %v299 = vmul.f32 %v287, %v291
    %303 = vrot.lane.b32.xlu0 %v297, 94
    %v304 = vpop.permute.xlu0 %303
    %305 = vrot.lane.b32.xlu0 %v298, 94
    %v306 = vpop.permute.xlu0 %305
    %307 = vrot.lane.b32.xlu0 %v299, 94
    %v308 = vpop.permute.xlu0 %307
    %vm309 = vcmask 769024
    %v310 = vsel %vm309, %v304, %v306
    %v311 = vsel %vm309, %v306, %v308
    %314 = vst [vmem:[#allocation3 + $0x100] sm:$0xff] %v310
    %315 = vst [vmem:[#allocation3 + $0x108] sm:$0xff] %v311
    %s316 = scalar_lea.vmem [#allocation4], 8
    %v317 = vld [vmem:[%s316] sm:$0xff]
    %v319 = vcombine.high %v317, %v317
    %320 = vrot.lane.b32.xlu0 %v317, 17
    %v321 = vpop.permute.xlu0 %320
    %322 = vrot.lane.b32.xlu0 %v319, 17
    %v323 = vpop.permute.xlu0 %322
    %v324 = vsel %vm31, %v321, %v323
    %328 = vst.msk [vmem:[#allocation2] sm:$0xf] %vm52, %v321
    %329 = vst [vmem:[#allocation2 + $0x8] sm:$0xf] %v324
    %330 = vst.msk [vmem:[#allocation2 + $0x10] sm:$0xf] %vm55, %v323
    %v331 = vld [vmem:[#allocation2] sm:$0xff]
    %v332 = vld [vmem:[#allocation2 + $0x8] sm:$0xff]
    %v333 = vmul.f32 %v331, %v73
    %v334 = vmul.f32 %v332, %v77
    %335 = vst [vmem:[#allocation3 + $0x10] sm:$0xff] %v333
    %336 = vst [vmem:[#allocation3 + $0x18] sm:$0xff] %v334
    %v337 = vld [vmem:[#allocation2] sm:$0xff]
    %v338 = vld [vmem:[#allocation2 + $0x8] sm:$0xff]
    %v339 = vld [vmem:[#allocation2 + $0x10] sm:$0xff]
    %343 = vrot.lane.b32.xlu0 %v337, 127
    %v344 = vpop.permute.xlu0 %343
    %345 = vrot.lane.b32.xlu0 %v338, 127
    %v346 = vpop.permute.xlu0 %345
    %347 = vrot.lane.b32.xlu0 %v339, 127
    %v348 = vpop.permute.xlu0 %347
    %v349 = vsel %vm94, %v344, %v346
    %v350 = vsel %vm94, %v346, %v348
    %353 = vst [vmem:[#allocation3 + $0x30] sm:$0xff] %v349
    %354 = vst [vmem:[#allocation3 + $0x38] sm:$0xff] %v350
    %v355 = vld [vmem:[#allocation2] sm:$0xff]
    %v356 = vld [vmem:[#allocation2 + $0x8] sm:$0xff]
    %v357 = vld [vmem:[#allocation2 + $0x10] sm:$0xff]
    %v358 = vmul.f32 %v355, %v125
    %v359 = vmul.f32 %v356, %v129
    %v360 = vmul.f32 %v357, %v127
    %364 = vrot.lane.b32.xlu0 %v358, 126
    %v365 = vpop.permute.xlu0 %364
    %366 = vrot.lane.b32.xlu0 %v359, 126
    %v367 = vpop.permute.xlu0 %366
    %368 = vrot.lane.b32.xlu0 %v360, 126
    %v369 = vpop.permute.xlu0 %368
    %v370 = vsel %vm145, %v365, %v367
    %v371 = vsel %vm145, %v367, %v369
    %374 = vst [vmem:[#allocation3 + $0x50] sm:$0xff] %v370
    %375 = vst [vmem:[#allocation3 + $0x58] sm:$0xff] %v371
    %v376 = vld [vmem:[#allocation2] sm:$0xff]
    %v377 = vld [vmem:[#allocation2 + $0x8] sm:$0xff]
    %v378 = vld [vmem:[#allocation2 + $0x10] sm:$0xff]
    %v379 = vmul.f32 %v376, %v158
    %v380 = vmul.f32 %v377, %v162
    %v381 = vmul.f32 %v378, %v160
    %385 = vrot.lane.b32.xlu0 %v379, 112
    %v386 = vpop.permute.xlu0 %385
    %387 = vrot.lane.b32.xlu0 %v380, 112
    %v388 = vpop.permute.xlu0 %387
    %389 = vrot.lane.b32.xlu0 %v381, 112
    %v390 = vpop.permute.xlu0 %389
    %v391 = vsel %vm178, %v386, %v388
    %v392 = vsel %vm178, %v388, %v390
    %395 = vst [vmem:[#allocation3 + $0x70] sm:$0xff] %v391
    %396 = vst [vmem:[#allocation3 + $0x78] sm:$0xff] %v392
    %v397 = vld [vmem:[#allocation2] sm:$0xff]
    %v398 = vld [vmem:[#allocation2 + $0x8] sm:$0xff]
    %v399 = vld [vmem:[#allocation2 + $0x10] sm:$0xff]
    %403 = vrot.lane.b32.xlu0 %v397, 111
    %v404 = vpop.permute.xlu0 %403
    %405 = vrot.lane.b32.xlu0 %v398, 111
    %v406 = vpop.permute.xlu0 %405
    %407 = vrot.lane.b32.xlu0 %v399, 111
    %v408 = vpop.permute.xlu0 %407
    %v409 = vsel %vm197, %v404, %v406
    %v410 = vsel %vm197, %v406, %v408
    %413 = vst [vmem:[#allocation3 + $0x90] sm:$0xff] %v409
    %414 = vst [vmem:[#allocation3 + $0x98] sm:$0xff] %v410
    %v415 = vld [vmem:[#allocation2] sm:$0xff]
    %v416 = vld [vmem:[#allocation2 + $0x8] sm:$0xff]
    %v417 = vld [vmem:[#allocation2 + $0x10] sm:$0xff]
    %v418 = vmul.f32 %v415, %v208
    %v419 = vmul.f32 %v416, %v212
    %v420 = vmul.f32 %v417, %v210
    %424 = vrot.lane.b32.xlu0 %v418, 110
    %v425 = vpop.permute.xlu0 %424
    %426 = vrot.lane.b32.xlu0 %v419, 110
    %v427 = vpop.permute.xlu0 %426
    %428 = vrot.lane.b32.xlu0 %v420, 110
    %v429 = vpop.permute.xlu0 %428
    %v430 = vsel %vm228, %v425, %v427
    %v431 = vsel %vm228, %v427, %v429
    %434 = vst [vmem:[#allocation3 + $0xb0] sm:$0xff] %v430
    %435 = vst [vmem:[#allocation3 + $0xb8] sm:$0xff] %v431
    %v436 = vld [vmem:[#allocation2] sm:$0xff]
    %v437 = vld [vmem:[#allocation2 + $0x8] sm:$0xff]
    %v438 = vld [vmem:[#allocation2 + $0x10] sm:$0xff]
    %v439 = vmul.f32 %v436, %v239
    %v440 = vmul.f32 %v437, %v243
    %v441 = vmul.f32 %v438, %v241
    %445 = vrot.lane.b32.xlu0 %v439, 96
    %v446 = vpop.permute.xlu0 %445
    %447 = vrot.lane.b32.xlu0 %v440, 96
    %v448 = vpop.permute.xlu0 %447
    %449 = vrot.lane.b32.xlu0 %v441, 96
    %v450 = vpop.permute.xlu0 %449
    %v451 = vsel %vm259, %v446, %v448
    %v452 = vsel %vm259, %v448, %v450
    %455 = vst [vmem:[#allocation3 + $0xd0] sm:$0xff] %v451
    %456 = vst [vmem:[#allocation3 + $0xd8] sm:$0xff] %v452
    %v457 = vld [vmem:[#allocation2] sm:$0xff]
    %v458 = vld [vmem:[#allocation2 + $0x8] sm:$0xff]
    %v459 = vld [vmem:[#allocation2 + $0x10] sm:$0xff]
    %463 = vrot.lane.b32.xlu0 %v457, 95
    %v464 = vpop.permute.xlu0 %463
    %465 = vrot.lane.b32.xlu0 %v458, 95
    %v466 = vpop.permute.xlu0 %465
    %467 = vrot.lane.b32.xlu0 %v459, 95
    %v468 = vpop.permute.xlu0 %467
    %v469 = vsel %vm278, %v464, %v466
    %v470 = vsel %vm278, %v466, %v468
    %473 = vst [vmem:[#allocation3 + $0xf0] sm:$0xff] %v469
    %474 = vst [vmem:[#allocation3 + $0xf8] sm:$0xff] %v470
    %v475 = vld [vmem:[#allocation2] sm:$0xff]
    %v476 = vld [vmem:[#allocation2 + $0x8] sm:$0xff]
    %v477 = vld [vmem:[#allocation2 + $0x10] sm:$0xff]
    %v478 = vmul.f32 %v475, %v289
    %v479 = vmul.f32 %v476, %v293
    %v480 = vmul.f32 %v477, %v291
    %484 = vrot.lane.b32.xlu0 %v478, 94
    %v485 = vpop.permute.xlu0 %484
    %486 = vrot.lane.b32.xlu0 %v479, 94
    %v487 = vpop.permute.xlu0 %486
    %488 = vrot.lane.b32.xlu0 %v480, 94
    %v489 = vpop.permute.xlu0 %488
    %v490 = vsel %vm309, %v485, %v487
    %v491 = vsel %vm309, %v487, %v489
    %494 = vst [vmem:[#allocation3 + $0x110] sm:$0xff] %v490
    %495 = vst [vmem:[#allocation3 + $0x118] sm:$0xff] %v491
    %v496 = vld [vmem:[%s1] sm:$0xff]
    %v497 = vld [vmem:[#allocation3] sm:$0xff]
    %v498 = vld [vmem:[#allocation3 + $0x8] sm:$0xff]
    %v499 = vld [vmem:[#allocation3 + $0x10] sm:$0xff]
    %v500 = vld [vmem:[#allocation3 + $0x18] sm:$0xff]
    %v501 = vld [vmem:[#allocation3 + $0x20] sm:$0xff]
    %v502 = vld [vmem:[#allocation3 + $0x28] sm:$0xff]
    %v503 = vld [vmem:[#allocation3 + $0x30] sm:$0xff]
    %v504 = vld [vmem:[#allocation3 + $0x38] sm:$0xff]
    %v505 = vld [vmem:[#allocation3 + $0x40] sm:$0xff]
    %v506 = vld [vmem:[#allocation3 + $0x48] sm:$0xff]
    %v507 = vld [vmem:[#allocation3 + $0x50] sm:$0xff]
    %v508 = vld [vmem:[#allocation3 + $0x58] sm:$0xff]
    %v509 = vld [vmem:[#allocation3 + $0x60] sm:$0xff]
    %v510 = vld [vmem:[#allocation3 + $0x68] sm:$0xff]
    %v511 = vld [vmem:[#allocation3 + $0x70] sm:$0xff]
    %v512 = vld [vmem:[#allocation3 + $0x78] sm:$0xff]
    %v513 = vld [vmem:[#allocation3 + $0x80] sm:$0xff]
    %v514 = vld [vmem:[#allocation3 + $0x88] sm:$0xff]
    %v515 = vld [vmem:[#allocation3 + $0x90] sm:$0xff]
    %v516 = vld [vmem:[#allocation3 + $0x98] sm:$0xff]
    %v517 = vld [vmem:[#allocation3 + $0xa0] sm:$0xff]
    %v518 = vld [vmem:[#allocation3 + $0xa8] sm:$0xff]
    %v519 = vld [vmem:[#allocation3 + $0xb0] sm:$0xff]
    %v520 = vld [vmem:[#allocation3 + $0xb8] sm:$0xff]
    %v521 = vld [vmem:[#allocation3 + $0xc0] sm:$0xff]
    %v522 = vld [vmem:[#allocation3 + $0xc8] sm:$0xff]
    %v523 = vld [vmem:[#allocation3 + $0xd0] sm:$0xff]
    %v524 = vld [vmem:[#allocation3 + $0xd8] sm:$0xff]
    %v525 = vld [vmem:[#allocation3 + $0xe0] sm:$0xff]
    %v526 = vld [vmem:[#allocation3 + $0xe8] sm:$0xff]
    %v527 = vld [vmem:[#allocation3 + $0xf0] sm:$0xff]
    %v528 = vld [vmem:[#allocation3 + $0xf8] sm:$0xff]
    %v529 = vld [vmem:[#allocation3 + $0x100] sm:$0xff]
    %v530 = vld [vmem:[#allocation3 + $0x108] sm:$0xff]
    %v531 = vld [vmem:[#allocation3 + $0x110] sm:$0xff]
    %v532 = vld [vmem:[#allocation3 + $0x118] sm:$0xff]
    %v533 = vld [vmem:[%s2] sm:$0xff]
    %535 = vset.pattern.permute.xlu0 0
    %536 = vperm.xlu0 %535, %v533
    %v537 = vpop.permute.xlu0 %536
    %vm539 = vcmask 588800
    %v541 = vsel %vm539, %v496, 0
    %543 = vmatprep.subr.mxu0 0.0
    %544 = vmatpush1.msra.mxu0 0.0
    %545 = vmatprep.subr.mxu0 0.0
    %546 = vmatpush1.msra.mxu0 0.0
    %547 = vmatprep.subr.mxu0 0.0
    %548 = vmatpush1.msra.mxu0 0.0
    %549 = vmatprep.subr.mxu0 0.0
    %550 = vmatpush1.msra.mxu0 0.0
    %551 = vmatprep.subr.mxu0 0.0
    %552 = vmatpush1.msra.mxu0 0.0
    %553 = vmatprep.subr.mxu0 0.0
    %554 = vmatpush1.msra.mxu0 0.0
    %555 = vmatprep.subr.mxu0 0.0
    %556 = vmatpush1.msra.mxu0 0.0
    %557 = vmatprep.subr.mxu0 %v530
    %558 = vmatpush1.msra.mxu0 %v529
    %559 = vmatprep.subr.mxu0 %v526
    %560 = vmatpush1.msra.mxu0 %v525
    %561 = vmatprep.subr.mxu0 %v522
    %562 = vmatpush1.msra.mxu0 %v521
    %563 = vmatprep.subr.mxu0 %v518
    %564 = vmatpush1.msra.mxu0 %v517
    %565 = vmatprep.subr.mxu0 %v514
    %566 = vmatpush1.msra.mxu0 %v513
    %567 = vmatprep.subr.mxu0 %v510
    %568 = vmatpush1.msra.mxu0 %v509
    %569 = vmatprep.subr.mxu0 %v506
    %570 = vmatpush1.msra.mxu0 %v505
    %571 = vmatprep.subr.mxu0 %v502
    %572 = vmatpush1.msra.mxu0 %v501
    %573 = vmatprep.subr.mxu0 %v498
    %574 = vmatpush1.msra.mxu0 %v497
    %575 = vmatprep.subr.mxu0 0.0
    %576 = vmatpush2.msra.mxu0 0.0
    %577 = vmatprep.subr.mxu0 0.0
    %578 = vmatpush2.msra.mxu0 0.0
    %579 = vmatprep.subr.mxu0 0.0
    %580 = vmatpush2.msra.mxu0 0.0
    %581 = vmatprep.subr.mxu0 0.0
    %582 = vmatpush2.msra.mxu0 0.0
    %583 = vmatprep.subr.mxu0 0.0
    %584 = vmatpush2.msra.mxu0 0.0
    %585 = vmatprep.subr.mxu0 0.0
    %586 = vmatpush2.msra.mxu0 0.0
    %587 = vmatprep.subr.mxu0 0.0
    %588 = vmatpush2.msra.mxu0 0.0
    %589 = vmatprep.subr.mxu0 0.0
    %590 = vmatpush2.msra.mxu0 0.0
    %591 = vmatprep.subr.mxu0 0.0
    %592 = vmatpush2.msra.mxu0 0.0
    %593 = vmatprep.subr.mxu0 0.0
    %594 = vmatpush2.msra.mxu0 0.0
    %595 = vmatprep.subr.mxu0 0.0
    %596 = vmatpush2.msra.mxu0 0.0
    %597 = vmatprep.subr.mxu0 0.0
    %598 = vmatpush2.msra.mxu0 0.0
    %599 = vmatprep.subr.mxu0 0.0
    %600 = vmatpush2.msra.mxu0 0.0
    %601 = vmatprep.subr.mxu0 0.0
    %602 = vmatpush2.msra.mxu0 0.0
    %603 = vmatprep.subr.mxu0 0.0
    %604 = vmatpush2.msra.mxu0 0.0
    %605 = vmatprep.subr.mxu0 0.0
    %606 = vmatpush2.msra.mxu0 0.0
    %607 = vmatprep.mubr.f32.mxu0 0.0
    %608 = vmatmul.mubr.f32.gmra.mxu0 %v541
    %v609 = vpop.f32.mrf.mxu0
    %v610 = vadd.f32 %v537, %v609
    %v611 = vpop.f32.mrf.mxu0
    %v612 = vadd.f32 %v537, %v611
    %613 = vdwg.mxu0
    %614 = vmatprep.subr.mxu0 0.0
    %615 = vmatpush1.msra.mxu0 0.0
    %616 = vmatprep.subr.mxu0 0.0
    %617 = vmatpush1.msra.mxu0 0.0
    %618 = vmatprep.subr.mxu0 0.0
    %619 = vmatpush1.msra.mxu0 0.0
    %620 = vmatprep.subr.mxu0 0.0
    %621 = vmatpush1.msra.mxu0 0.0
    %622 = vmatprep.subr.mxu0 0.0
    %623 = vmatpush1.msra.mxu0 0.0
    %624 = vmatprep.subr.mxu0 0.0
    %625 = vmatpush1.msra.mxu0 0.0
    %626 = vmatprep.subr.mxu0 0.0
    %627 = vmatpush1.msra.mxu0 0.0
    %628 = vmatprep.subr.mxu0 %v532
    %629 = vmatpush1.msra.mxu0 %v531
    %630 = vmatprep.subr.mxu0 %v528
    %631 = vmatpush1.msra.mxu0 %v527
    %632 = vmatprep.subr.mxu0 %v524
    %633 = vmatpush1.msra.mxu0 %v523
    %634 = vmatprep.subr.mxu0 %v520
    %635 = vmatpush1.msra.mxu0 %v519
    %636 = vmatprep.subr.mxu0 %v516
    %637 = vmatpush1.msra.mxu0 %v515
    %638 = vmatprep.subr.mxu0 %v512
    %639 = vmatpush1.msra.mxu0 %v511
    %640 = vmatprep.subr.mxu0 %v508
    %641 = vmatpush1.msra.mxu0 %v507
    %642 = vmatprep.subr.mxu0 %v504
    %643 = vmatpush1.msra.mxu0 %v503
    %644 = vmatprep.subr.mxu0 %v500
    %645 = vmatpush1.msra.mxu0 %v499
    %646 = vmatprep.subr.mxu0 0.0
    %647 = vmatpush2.msra.mxu0 0.0
    %648 = vmatprep.subr.mxu0 0.0
    %649 = vmatpush2.msra.mxu0 0.0
    %650 = vmatprep.subr.mxu0 0.0
    %651 = vmatpush2.msra.mxu0 0.0
    %652 = vmatprep.subr.mxu0 0.0
    %653 = vmatpush2.msra.mxu0 0.0
    %654 = vmatprep.subr.mxu0 0.0
    %655 = vmatpush2.msra.mxu0 0.0
    %656 = vmatprep.subr.mxu0 0.0
    %657 = vmatpush2.msra.mxu0 0.0
    %658 = vmatprep.subr.mxu0 0.0
    %659 = vmatpush2.msra.mxu0 0.0
    %660 = vmatprep.subr.mxu0 0.0
    %661 = vmatpush2.msra.mxu0 0.0
    %662 = vmatprep.subr.mxu0 0.0
    %663 = vmatpush2.msra.mxu0 0.0
    %664 = vmatprep.subr.mxu0 0.0
    %665 = vmatpush2.msra.mxu0 0.0
    %666 = vmatprep.subr.mxu0 0.0
    %667 = vmatpush2.msra.mxu0 0.0
    %668 = vmatprep.subr.mxu0 0.0
    %669 = vmatpush2.msra.mxu0 0.0
    %670 = vmatprep.subr.mxu0 0.0
    %671 = vmatpush2.msra.mxu0 0.0
    %672 = vmatprep.subr.mxu0 0.0
    %673 = vmatpush2.msra.mxu0 0.0
    %674 = vmatprep.subr.mxu0 0.0
    %675 = vmatpush2.msra.mxu0 0.0
    %676 = vmatprep.subr.mxu0 0.0
    %677 = vmatpush2.msra.mxu0 0.0
    %678 = vmatprep.mubr.f32.mxu0 0.0
    %679 = vmatmul.mubr.f32.gmra.mxu0 %v541
    %v680 = vpop.f32.mrf.mxu0
    %v681 = vadd.f32 %v537, %v680
    %v682 = vpop.f32.mrf.mxu0
    %v683 = vadd.f32 %v537, %v682
    %684 = vdwg.mxu0
    %v685 = vmax.f32 %v610, 0.0
    %v686 = vmax.f32 %v612, 0.0
    %v687 = vmax.f32 %v681, 0.0
    %v688 = vmax.f32 %v683, 0.0
    %v689 = vld [vmem:[#allocation4] sm:$0xff]
    %v691 = vcombine.high %v689, %v689
    %v695 = vrot.slane %v685, 4
    %v696 = vrot.slane %v686, 4
    %vm699 = vcmask 1043456
    %v700 = vsel %vm699, %v689, %v695
    %v701 = vsel %vm699, %v691, %v696
    %702 = vst [vmem:[%s4] sm:$0xff] %v700
    %703 = vst [vmem:[%s4 + $0x8] sm:$0xff] %v701
    %704 = vst [vmem:[%s4 + $0x10] sm:$0xf] %v695
    %705 = vst [vmem:[%s4 + $0x18] sm:$0xf] %v696
    %v706 = vld [vmem:[%s316] sm:$0xff]
    %v708 = vcombine.high %v706, %v706
    %v712 = vrot.slane %v687, 4
    %v713 = vrot.slane %v688, 4
    %v716 = vsel %vm699, %v706, %v712
    %v717 = vsel %vm699, %v708, %v713
    %s718 = scalar_lea.vmem %s4, 32
    %719 = vst [vmem:[%s718] sm:$0xff] %v716
    %720 = vst [vmem:[%s718 + $0x8] sm:$0xff] %v717
    %721 = vst [vmem:[%s718 + $0x10] sm:$0xf] %v712
    %722 = vst [vmem:[%s718 + $0x18] sm:$0xf] %v713
    // Predicated region
    $region22: #{tpu_custom_call.1} parent=1 // pred_check
      _
    $region23: #{tpu_custom_call.1} parent=1 // pred_check_branch
      %724 = sbr.rel (0) target = $region25
    $region24: #{tpu_custom_call.1} parent=1 // pred_region
      _
    $region25: #{tpu_custom_call.1} parent=1 // pred_fallthru
      _
    // Predicated region
    $region26: #{tpu_custom_call.1} parent=1 // pred_check
      _
    $region27: #{tpu_custom_call.1} parent=1 // pred_check_branch
      %726 = sbr.rel (0) target = $region29
    $region28: #{tpu_custom_call.1} parent=1 // pred_region
      _
    $region29: #{tpu_custom_call.1} parent=1 // pred_fallthru
      _
    %727 = vsyncpa [#allocation5], 1

</llo_original>
